<compile_context>
chip_gen: v6e
topology: v6e:2x2x1
jax: 0.10.0
libtpu: 0.0.40
codegen_flags: <defaults>
</compile_context>

<pallas_src>
import functools

import jax
import jax.numpy as jnp
from jax.experimental import pallas as pl
from jax.experimental.pallas import tpu as pltpu


def _round_up(v, m):
    return ((v + m - 1) // m) * m


def _make_kernel(num_layer):
    """Pallas kernel for a PINN MLP with `num_layer` Linear layers (transposed layout)."""

    def kernel(*refs):
        # refs = (src_T, w1_T, b1, w2_T, b2, ..., wL_T, bL, out_T)
        src_ref = refs[0]
        out_ref = refs[-1]
        wb = refs[1:-1]

        # Layer 1: (hidden, K_pad) @ (K_pad, TB) + (hidden, 1) -> tanh.
        h = jnp.tanh(
            jnp.dot(wb[0][...], src_ref[...], preferred_element_type=jnp.float32)
            + wb[1][...]
        )

        # Hidden layers: (hidden, hidden) @ (hidden, TB) + bias -> tanh.
        idx = 2
        for _ in range(1, num_layer - 1):
            w_ref, b_ref = wb[idx], wb[idx + 1]
            idx += 2
            h = jnp.tanh(
                jnp.dot(w_ref[...], h, preferred_element_type=jnp.float32)
                + b_ref[...]
            )

        # Final layer: Linear, no activation.  (out_pad, hidden) @ (hidden, TB).
        w_ref, b_ref = wb[idx], wb[idx + 1]
        out = jnp.dot(w_ref[...], h, preferred_element_type=jnp.float32) + b_ref[...]
        out_ref[...] = out.astype(out_ref.dtype)

    return kernel


def pinn_forward(x, t, params, num_layer, block_batch=1024):
    """PINN forward pass, batch-tiled Pallas call in a transposed (feat, batch) layout.

    x: (B, dx) f32, t: (B, dt) f32.
    params: list of (W, b) per Linear layer, W: (fan_in, fan_out), b: (1, fan_out).
    """
    B = x.shape[0]
    in_dim = x.shape[-1] + t.shape[-1]
    out_dim = params[-1][0].shape[-1]
    dtype = x.dtype

    # ----- wrapper-side layout plumbing (cheap XLA ops, once per call) -----
    # Fused concat; pad feature dim to 8 sublanes; pad batch to a tile multiple.
    k_pad = _round_up(in_dim, 8)
    b_min = _round_up(max(B, 1), 128)
    tb = min(_round_up(block_batch, 128), b_min)     # lane-axis tile (multiple of 128)
    b_pad = _round_up(B, tb)

    src = jnp.concatenate([x, t], axis=-1)                        # (B, in_dim)
    src = jnp.pad(src, ((0, b_pad - B), (0, k_pad - in_dim)))     # (B_pad, K_pad)
    src_t = src.T                                                 # (K_pad, B_pad)

    # First-layer weight: zero-pad the fan_in rows (matches the zero-padded src).
    (w1, b1) = params[0]
    w1p = jnp.pad(w1, ((0, k_pad - in_dim), (0, 0)))
    operands = [src_t, w1p.T, b1.reshape(-1, 1)]

    # Hidden layers: transposed weights, column biases.
    for (w, b) in params[1:-1]:
        operands.extend([w.T, b.reshape(-1, 1)])

    # Final layer: pad out_dim up to 8 sublanes (zero columns -> discarded later).
    (wl, bl) = params[-1]
    out_pad = _round_up(out_dim, 8)
    wlp = jnp.pad(wl, ((0, 0), (0, out_pad - out_dim)))
    blp = jnp.pad(bl.reshape(-1, 1), ((0, out_pad - out_dim), (0, 0)))
    operands.extend([wlp.T, blp])

    grid = (b_pad // tb,)

    def batch_spec(rows):
        return pl.BlockSpec((rows, tb), lambda i: (0, i))

    def resident_spec(shape):
        return pl.BlockSpec(shape, lambda i: (0, 0))

    in_specs = [batch_spec(k_pad)]
    for op in operands[1:]:
        in_specs.append(resident_spec(op.shape))

    out_t = pl.pallas_call(
        _make_kernel(num_layer),
        out_shape=jax.ShapeDtypeStruct((out_pad, b_pad), dtype),
        grid=grid,
        in_specs=in_specs,
        out_specs=batch_spec(out_pad),
        compiler_params=pltpu.CompilerParams(
            dimension_semantics=("parallel",),
        ),
    )(*operands)

    # Back to (B, out_dim); padded rows/cols are dropped.
    return out_t.T[:B, :out_dim]


def init_params(key, in_dim, hidden_dim, out_dim, num_layer):
    """Deterministic PyTorch-style (uniform +/- 1/sqrt(fan_in)) init."""
    dims = [in_dim] + [hidden_dim] * (num_layer - 1) + [out_dim]
    params = []
    for i in range(num_layer):
        fan_in, fan_out = dims[i], dims[i + 1]
        key, kw, kb = jax.random.split(key, 3)
        bound = 1.0 / jnp.sqrt(fan_in)
        w = jax.random.uniform(kw, (fan_in, fan_out), jnp.float32, -bound, bound)
        b = jax.random.uniform(kb, (1, fan_out), jnp.float32, -bound, bound)
        params.append((w, b))
    return params


def reference_forward(x, t, params):
    """Pure-JAX reference (mirrors the PyTorch forward exactly)."""
    h = jnp.concatenate([x, t], axis=-1)
    for (w, b) in params[:-1]:
        h = jnp.tanh(h @ w + b)
    w, b = params[-1]
    return h @ w + b


if __name__ == "__main__":
    # Small shapes consistent with a PINN: 2 spatial coords + 1 time coord.
    B, dx, dt_dim = 8, 2, 1
    in_dim = dx + dt_dim
    hidden_dim = 32
    out_dim = 1
    num_layer = 4  # 3x (Linear+Tanh) + final Linear

    key = jax.random.PRNGKey(0)
    key, kx, kt = jax.random.split(key, 3)
    x = jax.random.normal(kx, (B, dx), jnp.float32)
    t = jax.random.normal(kt, (B, dt_dim), jnp.float32)

    params = init_params(key, in_dim, hidden_dim, out_dim, num_layer)

    fwd = jax.jit(functools.partial(pinn_forward, num_layer=num_layer))
    out = fwd(x, t, params)
    out = jax.block_until_ready(out)

    ref = reference_forward(x, t, params)
    assert out.shape == (B, out_dim), out.shape
    assert jnp.allclose(out, ref, atol=1e-5, rtol=1e-5), (out, ref)

    print("KERNEL_OK")
</pallas_src>

<mosaic_0001>
module attributes {stable_mosaic.version = 11 : i64} {
  func.func @kernel(%arg0: i32, %arg1: memref<8x128xf32, #tpu.memory_space<vmem>>, %arg2: memref<32x8xf32, #tpu.memory_space<vmem>>, %arg3: memref<32x1xf32, #tpu.memory_space<vmem>>, %arg4: memref<32x32xf32, #tpu.memory_space<vmem>>, %arg5: memref<32x1xf32, #tpu.memory_space<vmem>>, %arg6: memref<32x32xf32, #tpu.memory_space<vmem>>, %arg7: memref<32x1xf32, #tpu.memory_space<vmem>>, %arg8: memref<8x32xf32, #tpu.memory_space<vmem>>, %arg9: memref<8x1xf32, #tpu.memory_space<vmem>>, %arg10: memref<8x128xf32, #tpu.memory_space<vmem>>) attributes {dimension_semantics = [#tpu.dimension_semantics<parallel>], iteration_bounds = array<i64: 1>, scalar_prefetch = 0 : i64, scratch_operands = 0 : i64, tpu.core_type = #tpu.core_type<tc>, window_params = [{transform_indices = @transform_0, window_bounds = array<i64: 8, 128>}, {pipeline_mode = #tpu.pipeline_mode<synchronous>, transform_indices = @transform_1, window_bounds = array<i64: 32, 8>}, {pipeline_mode = #tpu.pipeline_mode<synchronous>, transform_indices = @transform_2, window_bounds = array<i64: 32, 1>}, {pipeline_mode = #tpu.pipeline_mode<synchronous>, transform_indices = @transform_3, window_bounds = array<i64: 32, 32>}, {pipeline_mode = #tpu.pipeline_mode<synchronous>, transform_indices = @transform_4, window_bounds = array<i64: 32, 1>}, {pipeline_mode = #tpu.pipeline_mode<synchronous>, transform_indices = @transform_5, window_bounds = array<i64: 32, 32>}, {pipeline_mode = #tpu.pipeline_mode<synchronous>, transform_indices = @transform_6, window_bounds = array<i64: 32, 1>}, {pipeline_mode = #tpu.pipeline_mode<synchronous>, transform_indices = @transform_7, window_bounds = array<i64: 8, 32>}, {pipeline_mode = #tpu.pipeline_mode<synchronous>, transform_indices = @transform_8, window_bounds = array<i64: 8, 1>}, {transform_indices = @transform_9, window_bounds = array<i64: 8, 128>}]} {
    %c0 = arith.constant 0 : index
    %c0_0 = arith.constant 0 : index
    %0 = vector.load %arg2[%c0, %c0_0] : memref<32x8xf32, #tpu.memory_space<vmem>>, vector<32x8xf32>
    %c0_1 = arith.constant 0 : index
    %c0_2 = arith.constant 0 : index
    %1 = vector.load %arg1[%c0_1, %c0_2] : memref<8x128xf32, #tpu.memory_space<vmem>>, vector<8x128xf32>
    %cst = arith.constant dense<0.000000e+00> : vector<32x128xf32>
    %2 = tpu.matmul %0, %1, %cst {dimension_numbers = #tpu.dot_dimension_numbers<[1], [0], [0], [1], [0, 0, 1, 1], [], []>} : vector<32x8xf32>, vector<8x128xf32>, vector<32x128xf32> -> vector<32x128xf32>
    %c0_3 = arith.constant 0 : index
    %c0_4 = arith.constant 0 : index
    %3 = vector.load %arg3[%c0_3, %c0_4] : memref<32x1xf32, #tpu.memory_space<vmem>>, vector<32x1xf32>
    %4 = vector.broadcast %3 : vector<32x1xf32> to vector<32x128xf32>
    %5 = arith.addf %2, %4 : vector<32x128xf32>
    %6 = math.tanh %5 : vector<32x128xf32>
    %c0_5 = arith.constant 0 : index
    %c0_6 = arith.constant 0 : index
    %7 = vector.load %arg4[%c0_5, %c0_6] : memref<32x32xf32, #tpu.memory_space<vmem>>, vector<32x32xf32>
    %cst_7 = arith.constant dense<0.000000e+00> : vector<32x128xf32>
    %8 = tpu.matmul %7, %6, %cst_7 {dimension_numbers = #tpu.dot_dimension_numbers<[1], [0], [0], [1], [0, 0, 1, 1], [], []>} : vector<32x32xf32>, vector<32x128xf32>, vector<32x128xf32> -> vector<32x128xf32>
    %c0_8 = arith.constant 0 : index
    %c0_9 = arith.constant 0 : index
    %9 = vector.load %arg5[%c0_8, %c0_9] : memref<32x1xf32, #tpu.memory_space<vmem>>, vector<32x1xf32>
    %10 = vector.broadcast %9 : vector<32x1xf32> to vector<32x128xf32>
    %11 = arith.addf %8, %10 : vector<32x128xf32>
    %12 = math.tanh %11 : vector<32x128xf32>
    %c0_10 = arith.constant 0 : index
    %c0_11 = arith.constant 0 : index
    %13 = vector.load %arg6[%c0_10, %c0_11] : memref<32x32xf32, #tpu.memory_space<vmem>>, vector<32x32xf32>
    %cst_12 = arith.constant dense<0.000000e+00> : vector<32x128xf32>
    %14 = tpu.matmul %13, %12, %cst_12 {dimension_numbers = #tpu.dot_dimension_numbers<[1], [0], [0], [1], [0, 0, 1, 1], [], []>} : vector<32x32xf32>, vector<32x128xf32>, vector<32x128xf32> -> vector<32x128xf32>
    %c0_13 = arith.constant 0 : index
    %c0_14 = arith.constant 0 : index
    %15 = vector.load %arg7[%c0_13, %c0_14] : memref<32x1xf32, #tpu.memory_space<vmem>>, vector<32x1xf32>
    %16 = vector.broadcast %15 : vector<32x1xf32> to vector<32x128xf32>
    %17 = arith.addf %14, %16 : vector<32x128xf32>
    %18 = math.tanh %17 : vector<32x128xf32>
    %c0_15 = arith.constant 0 : index
    %c0_16 = arith.constant 0 : index
    %19 = vector.load %arg8[%c0_15, %c0_16] : memref<8x32xf32, #tpu.memory_space<vmem>>, vector<8x32xf32>
    %cst_17 = arith.constant dense<0.000000e+00> : vector<8x128xf32>
    %20 = tpu.matmul %19, %18, %cst_17 {dimension_numbers = #tpu.dot_dimension_numbers<[1], [0], [0], [1], [0, 0, 1, 1], [], []>} : vector<8x32xf32>, vector<32x128xf32>, vector<8x128xf32> -> vector<8x128xf32>
    %c0_18 = arith.constant 0 : index
    %c0_19 = arith.constant 0 : index
    %21 = vector.load %arg9[%c0_18, %c0_19] : memref<8x1xf32, #tpu.memory_space<vmem>>, vector<8x1xf32>
    %22 = vector.broadcast %21 : vector<8x1xf32> to vector<8x128xf32>
    %23 = arith.addf %20, %22 : vector<8x128xf32>
    %c0_20 = arith.constant 0 : index
    %c0_21 = arith.constant 0 : index
    %24 = vector.load %arg10[%c0_20, %c0_21] : memref<8x128xf32, #tpu.memory_space<vmem>>, vector<8x128xf32>
    tpu.vector_store %arg10[%c0_20, %c0_21], %23 {strides = array<i32>} : memref<8x128xf32, #tpu.memory_space<vmem>>, vector<8x128xf32>,
    return
  }
  func.func @transform_0(%arg0: i32) -> (i32, i32) {
    %c0_i32 = arith.constant 0 : i32
    %c0_i32_0 = arith.constant 0 : i32
    return %c0_i32, %arg0 : i32, i32
  }
  func.func @transform_1(%arg0: i32) -> (i32, i32) {
    %c0_i32 = arith.constant 0 : i32
    %c0_i32_0 = arith.constant 0 : i32
    %c0_i32_1 = arith.constant 0 : i32
    return %c0_i32, %c0_i32_0 : i32, i32
  }
  func.func @transform_2(%arg0: i32) -> (i32, i32) {
    %c0_i32 = arith.constant 0 : i32
    %c0_i32_0 = arith.constant 0 : i32
    %c0_i32_1 = arith.constant 0 : i32
    return %c0_i32, %c0_i32_0 : i32, i32
  }
  func.func @transform_3(%arg0: i32) -> (i32, i32) {
    %c0_i32 = arith.constant 0 : i32
    %c0_i32_0 = arith.constant 0 : i32
    %c0_i32_1 = arith.constant 0 : i32
    return %c0_i32, %c0_i32_0 : i32, i32
  }
  func.func @transform_4(%arg0: i32) -> (i32, i32) {
    %c0_i32 = arith.constant 0 : i32
    %c0_i32_0 = arith.constant 0 : i32
    %c0_i32_1 = arith.constant 0 : i32
    return %c0_i32, %c0_i32_0 : i32, i32
  }
  func.func @transform_5(%arg0: i32) -> (i32, i32) {
    %c0_i32 = arith.constant 0 : i32
    %c0_i32_0 = arith.constant 0 : i32
    %c0_i32_1 = arith.constant 0 : i32
    return %c0_i32, %c0_i32_0 : i32, i32
  }
  func.func @transform_6(%arg0: i32) -> (i32, i32) {
    %c0_i32 = arith.constant 0 : i32
    %c0_i32_0 = arith.constant 0 : i32
    %c0_i32_1 = arith.constant 0 : i32
    return %c0_i32, %c0_i32_0 : i32, i32
  }
  func.func @transform_7(%arg0: i32) -> (i32, i32) {
    %c0_i32 = arith.constant 0 : i32
    %c0_i32_0 = arith.constant 0 : i32
    %c0_i32_1 = arith.constant 0 : i32
    return %c0_i32, %c0_i32_0 : i32, i32
  }
  func.func @transform_8(%arg0: i32) -> (i32, i32) {
    %c0_i32 = arith.constant 0 : i32
    %c0_i32_0 = arith.constant 0 : i32
    %c0_i32_1 = arith.constant 0 : i32
    return %c0_i32, %c0_i32_0 : i32, i32
  }
  func.func @transform_9(%arg0: i32) -> (i32, i32) {
    %c0_i32 = arith.constant 0 : i32
    %c0_i32_0 = arith.constant 0 : i32
    return %c0_i32, %arg0 : i32, i32
  }
}

</mosaic_0001>

<llo_original>
// kernel: pinn_forward.1
$region0: #{pinn_forward.1}
  #allocation0 [shape = 'u32[]', space=smem, size = 0x4, offset = 0x4, fixed_abs, tag = 'smem constant byte address 0x4 - core index']
  #allocation1 [shape = 'u32[144,128]{1,0:T(1,128)}', space=vmem, size = 0x12000, scoped, tag = 'internal scratch']
  %s0 = inlined_call_operand.vmem [shape: f32[8,128], index: 0, kind: input, shape index: {}]
  %s1 = inlined_call_operand.vmem [shape: f32[32,8], index: 1, kind: input, shape index: {}]
  %s2 = inlined_call_operand.vmem [shape: f32[32,1], index: 2, kind: input, shape index: {}]
  %s3 = inlined_call_operand.vmem [shape: f32[32,32], index: 3, kind: input, shape index: {}]
  %s4 = inlined_call_operand.vmem [shape: f32[32,1], index: 4, kind: input, shape index: {}]
  %s5 = inlined_call_operand.vmem [shape: f32[32,32], index: 5, kind: input, shape index: {}]
  %s6 = inlined_call_operand.vmem [shape: f32[32,1], index: 6, kind: input, shape index: {}]
  %s7 = inlined_call_operand.vmem [shape: f32[8,32], index: 7, kind: input, shape index: {}]
  %s8 = inlined_call_operand.vmem [shape: f32[8,1], index: 8, kind: input, shape index: {}]
  %s9 = inlined_call_operand.vmem [shape: f32[8,128], index: 9, kind: output, shape index: {}]
  %s10 = sld [smem:[#allocation0]]
  $region46: #{pinn_forward.1} parent=0
    _
  %s12 = ssub.s32 1, %s10
  %s13 = scalar_select 0, %s12, %s10
  // Predicated region
  $region2: #{pinn_forward.1} parent=0 // pred_check
    _
  $region3: #{pinn_forward.1} parent=0 // pred_check_branch
    %15 = sbr.rel (0) target = $region5
  $region4: #{pinn_forward.1} parent=0 // pred_region
    _
  $region5: #{pinn_forward.1} parent=0 // pred_fallthru
    _
  // Predicated region
  $region6: #{pinn_forward.1} parent=0 // pred_check
    _
  $region7: #{pinn_forward.1} parent=0 // pred_check_branch
    %17 = sbr.rel (0) target = $region9
  $region8: #{pinn_forward.1} parent=0 // pred_region
    _
  $region9: #{pinn_forward.1} parent=0 // pred_fallthru
    _
  // Predicated region
  $region10: #{pinn_forward.1} parent=0 // pred_check
    _
  $region11: #{pinn_forward.1} parent=0 // pred_check_branch
    %19 = sbr.rel (0) target = $region13
  $region12: #{pinn_forward.1} parent=0 // pred_region
    _
  $region13: #{pinn_forward.1} parent=0 // pred_fallthru
    _
  // Predicated region
  $region14: #{pinn_forward.1} parent=0 // pred_check
    _
  $region15: #{pinn_forward.1} parent=0 // pred_check_branch
    %21 = sbr.rel (0) target = $region17
  $region16: #{pinn_forward.1} parent=0 // pred_region
    _
  $region17: #{pinn_forward.1} parent=0 // pred_fallthru
    _
  // Predicated region
  $region18: #{pinn_forward.1} parent=0 // pred_check
    _
  $region19: #{pinn_forward.1} parent=0 // pred_check_branch
    %23 = sbr.rel (0) target = $region21
  $region20: #{pinn_forward.1} parent=0 // pred_region
    _
  $region21: #{pinn_forward.1} parent=0 // pred_fallthru
    _
  // Predicated region
  $region22: #{pinn_forward.1} parent=0 // pred_check
    _
  $region23: #{pinn_forward.1} parent=0 // pred_check_branch
    %25 = sbr.rel (0) target = $region25
  $region24: #{pinn_forward.1} parent=0 // pred_region
    _
  $region25: #{pinn_forward.1} parent=0 // pred_fallthru
    _
  // Predicated region
  $region26: #{pinn_forward.1} parent=0 // pred_check
    _
  $region27: #{pinn_forward.1} parent=0 // pred_check_branch
    %27 = sbr.rel (0) target = $region29
  $region28: #{pinn_forward.1} parent=0 // pred_region
    _
  $region29: #{pinn_forward.1} parent=0 // pred_fallthru
    _
  // Predicated region
  $region30: #{pinn_forward.1} parent=0 // pred_check
    _
  $region31: #{pinn_forward.1} parent=0 // pred_check_branch
    %29 = sbr.rel (0) target = $region33
  $region32: #{pinn_forward.1} parent=0 // pred_region
    _
  $region33: #{pinn_forward.1} parent=0 // pred_fallthru
    _
  // Predicated region
  $region34: #{pinn_forward.1} parent=0 // pred_check
    _
  $region35: #{pinn_forward.1} parent=0 // pred_check_branch
    %31 = sbr.rel (0) target = $region37
  $region36: #{pinn_forward.1} parent=0 // pred_region
    _
  $region37: #{pinn_forward.1} parent=0 // pred_fallthru
    _
  %v32 = vld [vmem:[%s1] sm:$0xff]
  %v33 = vld [vmem:[%s1 + $0x8] sm:$0xff]
  %v34 = vld [vmem:[%s1 + $0x10] sm:$0xff]
  %v35 = vld [vmem:[%s1 + $0x18] sm:$0xff]
  %v36 = vld [vmem:[%s0] sm:$0xff]
  %v37 = vld [vmem:[%s2] sm:$0xff]
  %v38 = vld [vmem:[%s2 + $0x8] sm:$0xff]
  %v39 = vld [vmem:[%s2 + $0x10] sm:$0xff]
  %v40 = vld [vmem:[%s2 + $0x18] sm:$0xff]
  %42 = vset.pattern.permute.xlu0 0
  %43 = vperm.xlu0 %42, %v37
  %v44 = vpop.permute.xlu0 %43
  %47 = vset.pattern.permute.xlu0 0
  %48 = vperm.xlu0 %47, %v38
  %v49 = vpop.permute.xlu0 %48
  %52 = vset.pattern.permute.xlu0 0
  %53 = vperm.xlu0 %52, %v39
  %v54 = vpop.permute.xlu0 %53
  %57 = vset.pattern.permute.xlu0 0
  %58 = vperm.xlu0 %57, %v40
  %v59 = vpop.permute.xlu0 %58
  %vm61 = vcmask 64512
  %v63 = vsel %vm61, %v32, 0
  %v66 = vsel %vm61, %v33, 0
  %v69 = vsel %vm61, %v34, 0
  %v72 = vsel %vm61, %v35, 0
  %74 = vmatprep.subr.mxu0 0.0
  %75 = vmatpush1.msra.mxu0 0.0
  %76 = vmatprep.subr.mxu0 0.0
  %77 = vmatpush1.msra.mxu0 0.0
  %78 = vmatprep.subr.mxu0 0.0
  %79 = vmatpush1.msra.mxu0 0.0
  %80 = vmatprep.subr.mxu0 0.0
  %81 = vmatpush1.msra.mxu0 0.0
  %82 = vmatprep.subr.mxu0 0.0
  %83 = vmatpush1.msra.mxu0 0.0
  %84 = vmatprep.subr.mxu0 0.0
  %85 = vmatpush1.msra.mxu0 0.0
  %86 = vmatprep.subr.mxu0 0.0
  %87 = vmatpush1.msra.mxu0 0.0
  %88 = vmatprep.subr.mxu0 0.0
  %89 = vmatpush1.msra.mxu0 0.0
  %90 = vmatprep.subr.mxu0 0.0
  %91 = vmatpush1.msra.mxu0 0.0
  %92 = vmatprep.subr.mxu0 0.0
  %93 = vmatpush1.msra.mxu0 0.0
  %94 = vmatprep.subr.mxu0 0.0
  %95 = vmatpush1.msra.mxu0 0.0
  %96 = vmatprep.subr.mxu0 0.0
  %97 = vmatpush1.msra.mxu0 0.0
  %98 = vmatprep.subr.mxu0 0.0
  %99 = vmatpush1.msra.mxu0 0.0
  %100 = vmatprep.subr.mxu0 0.0
  %101 = vmatpush1.msra.mxu0 0.0
  %102 = vmatprep.subr.mxu0 0.0
  %103 = vmatpush1.msra.mxu0 0.0
  %104 = vmatprep.subr.mxu0 0.0
  %105 = vmatpush1.msra.mxu0 %v36
  %106 = vmatprep.subr.mxu0 0.0
  %107 = vmatpush2.msra.mxu0 0.0
  %108 = vmatprep.subr.mxu0 0.0
  %109 = vmatpush2.msra.mxu0 0.0
  %110 = vmatprep.subr.mxu0 0.0
  %111 = vmatpush2.msra.mxu0 0.0
  %112 = vmatprep.subr.mxu0 0.0
  %113 = vmatpush2.msra.mxu0 0.0
  %114 = vmatprep.subr.mxu0 0.0
  %115 = vmatpush2.msra.mxu0 0.0
  %116 = vmatprep.subr.mxu0 0.0
  %117 = vmatpush2.msra.mxu0 0.0
  %118 = vmatprep.subr.mxu0 0.0
  %119 = vmatpush2.msra.mxu0 0.0
  %120 = vmatprep.subr.mxu0 0.0
  %121 = vmatpush2.msra.mxu0 0.0
  %122 = vmatprep.subr.mxu0 0.0
  %123 = vmatpush2.msra.mxu0 0.0
  %124 = vmatprep.subr.mxu0 0.0
  %125 = vmatpush2.msra.mxu0 0.0
  %126 = vmatprep.subr.mxu0 0.0
  %127 = vmatpush2.msra.mxu0 0.0
  %128 = vmatprep.subr.mxu0 0.0
  %129 = vmatpush2.msra.mxu0 0.0
  %130 = vmatprep.subr.mxu0 0.0
  %131 = vmatpush2.msra.mxu0 0.0
  %132 = vmatprep.subr.mxu0 0.0
  %133 = vmatpush2.msra.mxu0 0.0
  %134 = vmatprep.subr.mxu0 0.0
  %135 = vmatpush2.msra.mxu0 0.0
  %136 = vmatprep.subr.mxu0 0.0
  %137 = vmatpush2.msra.mxu0 0.0
  %138 = vmatprep.mubr.f32.mxu0 0.0
  %139 = vmatmul.mubr.f32.gmra.mxu0 %v63
  %v140 = vpop.f32.mrf.mxu0
  %v141 = vadd.f32 %v44, %v140
  %v142 = vpop.f32.mrf.mxu0
  %143 = vmatprep.mubr.f32.mxu0 0.0
  %144 = vmatmul.mubr.f32.gmra.mxu0 %v66
  %v145 = vpop.f32.mrf.mxu0
  %v146 = vadd.f32 %v49, %v145
  %v147 = vpop.f32.mrf.mxu0
  %148 = vmatprep.mubr.f32.mxu0 0.0
  %149 = vmatmul.mubr.f32.gmra.mxu0 %v69
  %v150 = vpop.f32.mrf.mxu0
  %v151 = vadd.f32 %v54, %v150
  %v152 = vpop.f32.mrf.mxu0
  %153 = vmatprep.mubr.f32.mxu0 0.0
  %154 = vmatmul.mubr.f32.gmra.mxu0 %v72
  %v155 = vpop.f32.mrf.mxu0
  %v156 = vadd.f32 %v59, %v155
  %v157 = vpop.f32.mrf.mxu0
  %158 = vdwg.mxu0
  %v159 = vtanh.pop %v141
  %v160 = vtanh.pop %v146
  %v161 = vtanh.pop %v151
  %v162 = vtanh.pop %v156
  %v163 = vld [vmem:[%s3] sm:$0xff]
  %v164 = vld [vmem:[%s3 + $0x8] sm:$0xff]
  %v165 = vld [vmem:[%s3 + $0x10] sm:$0xff]
  %v166 = vld [vmem:[%s3 + $0x18] sm:$0xff]
  %v167 = vld [vmem:[%s4] sm:$0xff]
  %v168 = vld [vmem:[%s4 + $0x8] sm:$0xff]
  %v169 = vld [vmem:[%s4 + $0x10] sm:$0xff]
  %v170 = vld [vmem:[%s4 + $0x18] sm:$0xff]
  %172 = vset.pattern.permute.xlu0 0
  %173 = vperm.xlu0 %172, %v167
  %v174 = vpop.permute.xlu0 %173
  %177 = vset.pattern.permute.xlu0 0
  %178 = vperm.xlu0 %177, %v168
  %v179 = vpop.permute.xlu0 %178
  %182 = vset.pattern.permute.xlu0 0
  %183 = vperm.xlu0 %182, %v169
  %v184 = vpop.permute.xlu0 %183
  %187 = vset.pattern.permute.xlu0 0
  %188 = vperm.xlu0 %187, %v170
  %v189 = vpop.permute.xlu0 %188
  %vm191 = vcmask 261120
  %v193 = vsel %vm191, %v163, 0
  %v196 = vsel %vm191, %v164, 0
  %v199 = vsel %vm191, %v165, 0
  %v202 = vsel %vm191, %v166, 0
  %204 = vmatprep.subr.mxu0 0.0
  %205 = vmatpush1.msra.mxu0 0.0
  %206 = vmatprep.subr.mxu0 0.0
  %207 = vmatpush1.msra.mxu0 0.0
  %208 = vmatprep.subr.mxu0 0.0
  %209 = vmatpush1.msra.mxu0 0.0
  %210 = vmatprep.subr.mxu0 0.0
  %211 = vmatpush1.msra.mxu0 0.0
  %212 = vmatprep.subr.mxu0 0.0
  %213 = vmatpush1.msra.mxu0 0.0
  %214 = vmatprep.subr.mxu0 0.0
  %215 = vmatpush1.msra.mxu0 0.0
  %216 = vmatprep.subr.mxu0 0.0
  %217 = vmatpush1.msra.mxu0 0.0
  %218 = vmatprep.subr.mxu0 0.0
  %219 = vmatpush1.msra.mxu0 0.0
  %220 = vmatprep.subr.mxu0 0.0
  %221 = vmatpush1.msra.mxu0 0.0
  %222 = vmatprep.subr.mxu0 0.0
  %223 = vmatpush1.msra.mxu0 0.0
  %224 = vmatprep.subr.mxu0 0.0
  %225 = vmatpush1.msra.mxu0 0.0
  %226 = vmatprep.subr.mxu0 0.0
  %227 = vmatpush1.msra.mxu0 0.0
  %228 = vmatprep.subr.mxu0 0.0
  %229 = vmatpush1.msra.mxu0 %v162
  %230 = vmatprep.subr.mxu0 0.0
  %231 = vmatpush1.msra.mxu0 %v161
  %232 = vmatprep.subr.mxu0 0.0
  %233 = vmatpush1.msra.mxu0 %v160
  %234 = vmatprep.subr.mxu0 0.0
  %235 = vmatpush1.msra.mxu0 %v159
  %236 = vmatprep.subr.mxu0 0.0
  %237 = vmatpush2.msra.mxu0 0.0
  %238 = vmatprep.subr.mxu0 0.0
  %239 = vmatpush2.msra.mxu0 0.0
  %240 = vmatprep.subr.mxu0 0.0
  %241 = vmatpush2.msra.mxu0 0.0
  %242 = vmatprep.subr.mxu0 0.0
  %243 = vmatpush2.msra.mxu0 0.0
  %244 = vmatprep.subr.mxu0 0.0
  %245 = vmatpush2.msra.mxu0 0.0
  %246 = vmatprep.subr.mxu0 0.0
  %247 = vmatpush2.msra.mxu0 0.0
  %248 = vmatprep.subr.mxu0 0.0
  %249 = vmatpush2.msra.mxu0 0.0
  %250 = vmatprep.subr.mxu0 0.0
  %251 = vmatpush2.msra.mxu0 0.0
  %252 = vmatprep.subr.mxu0 0.0
  %253 = vmatpush2.msra.mxu0 0.0
  %254 = vmatprep.subr.mxu0 0.0
  %255 = vmatpush2.msra.mxu0 0.0
  %256 = vmatprep.subr.mxu0 0.0
  %257 = vmatpush2.msra.mxu0 0.0
  %258 = vmatprep.subr.mxu0 0.0
  %259 = vmatpush2.msra.mxu0 0.0
  %260 = vmatprep.subr.mxu0 0.0
  %261 = vmatpush2.msra.mxu0 0.0
  %262 = vmatprep.subr.mxu0 0.0
  %263 = vmatpush2.msra.mxu0 0.0
  %264 = vmatprep.subr.mxu0 0.0
  %265 = vmatpush2.msra.mxu0 0.0
  %266 = vmatprep.subr.mxu0 0.0
  %267 = vmatpush2.msra.mxu0 0.0
  %268 = vmatprep.mubr.f32.mxu0 0.0
  %269 = vmatmul.mubr.f32.gmra.mxu0 %v193
  %v270 = vpop.f32.mrf.mxu0
  %v271 = vadd.f32 %v174, %v270
  %v272 = vpop.f32.mrf.mxu0
  %273 = vmatprep.mubr.f32.mxu0 0.0
  %274 = vmatmul.mubr.f32.gmra.mxu0 %v196
  %v275 = vpop.f32.mrf.mxu0
  %v276 = vadd.f32 %v179, %v275
  %v277 = vpop.f32.mrf.mxu0
  %278 = vmatprep.mubr.f32.mxu0 0.0
  %279 = vmatmul.mubr.f32.gmra.mxu0 %v199
  %v280 = vpop.f32.mrf.mxu0
  %v281 = vadd.f32 %v184, %v280
  %v282 = vpop.f32.mrf.mxu0
  %283 = vmatprep.mubr.f32.mxu0 0.0
  %284 = vmatmul.mubr.f32.gmra.mxu0 %v202
  %v285 = vpop.f32.mrf.mxu0
  %v286 = vadd.f32 %v189, %v285
  %v287 = vpop.f32.mrf.mxu0
  %288 = vdwg.mxu0
  %v289 = vtanh.pop %v271
  %v290 = vtanh.pop %v276
  %v291 = vtanh.pop %v281
  %v292 = vtanh.pop %v286
  %v293 = vld [vmem:[%s5] sm:$0xff]
  %v294 = vld [vmem:[%s5 + $0x8] sm:$0xff]
  %v295 = vld [vmem:[%s5 + $0x10] sm:$0xff]
  %v296 = vld [vmem:[%s5 + $0x18] sm:$0xff]
  %v297 = vld [vmem:[%s6] sm:$0xff]
  %v298 = vld [vmem:[%s6 + $0x8] sm:$0xff]
  %v299 = vld [vmem:[%s6 + $0x10] sm:$0xff]
  %v300 = vld [vmem:[%s6 + $0x18] sm:$0xff]
  %302 = vset.pattern.permute.xlu0 0
  %303 = vperm.xlu0 %302, %v297
  %v304 = vpop.permute.xlu0 %303
  %307 = vset.pattern.permute.xlu0 0
  %308 = vperm.xlu0 %307, %v298
  %v309 = vpop.permute.xlu0 %308
  %312 = vset.pattern.permute.xlu0 0
  %313 = vperm.xlu0 %312, %v299
  %v314 = vpop.permute.xlu0 %313
  %317 = vset.pattern.permute.xlu0 0
  %318 = vperm.xlu0 %317, %v300
  %v319 = vpop.permute.xlu0 %318
  %v322 = vsel %vm191, %v293, 0
  %v325 = vsel %vm191, %v294, 0
  %v328 = vsel %vm191, %v295, 0
  %v331 = vsel %vm191, %v296, 0
  %333 = vmatprep.subr.mxu0 0.0
  %334 = vmatpush1.msra.mxu0 0.0
  %335 = vmatprep.subr.mxu0 0.0
  %336 = vmatpush1.msra.mxu0 0.0
  %337 = vmatprep.subr.mxu0 0.0
  %338 = vmatpush1.msra.mxu0 0.0
  %339 = vmatprep.subr.mxu0 0.0
  %340 = vmatpush1.msra.mxu0 0.0
  %341 = vmatprep.subr.mxu0 0.0
  %342 = vmatpush1.msra.mxu0 0.0
  %343 = vmatprep.subr.mxu0 0.0
  %344 = vmatpush1.msra.mxu0 0.0
  %345 = vmatprep.subr.mxu0 0.0
  %346 = vmatpush1.msra.mxu0 0.0
  %347 = vmatprep.subr.mxu0 0.0
  %348 = vmatpush1.msra.mxu0 0.0
  %349 = vmatprep.subr.mxu0 0.0
  %350 = vmatpush1.msra.mxu0 0.0
  %351 = vmatprep.subr.mxu0 0.0
  %352 = vmatpush1.msra.mxu0 0.0
  %353 = vmatprep.subr.mxu0 0.0
  %354 = vmatpush1.msra.mxu0 0.0
  %355 = vmatprep.subr.mxu0 0.0
  %356 = vmatpush1.msra.mxu0 0.0
  %357 = vmatprep.subr.mxu0 0.0
  %358 = vmatpush1.msra.mxu0 %v292
  %359 = vmatprep.subr.mxu0 0.0
  %360 = vmatpush1.msra.mxu0 %v291
  %361 = vmatprep.subr.mxu0 0.0
  %362 = vmatpush1.msra.mxu0 %v290
  %363 = vmatprep.subr.mxu0 0.0
  %364 = vmatpush1.msra.mxu0 %v289
  %365 = vmatprep.subr.mxu0 0.0
  %366 = vmatpush2.msra.mxu0 0.0
  %367 = vmatprep.subr.mxu0 0.0
  %368 = vmatpush2.msra.mxu0 0.0
  %369 = vmatprep.subr.mxu0 0.0
  %370 = vmatpush2.msra.mxu0 0.0
  %371 = vmatprep.subr.mxu0 0.0
  %372 = vmatpush2.msra.mxu0 0.0
  %373 = vmatprep.subr.mxu0 0.0
  %374 = vmatpush2.msra.mxu0 0.0
  %375 = vmatprep.subr.mxu0 0.0
  %376 = vmatpush2.msra.mxu0 0.0
  %377 = vmatprep.subr.mxu0 0.0
  %378 = vmatpush2.msra.mxu0 0.0
  %379 = vmatprep.subr.mxu0 0.0
  %380 = vmatpush2.msra.mxu0 0.0
  %381 = vmatprep.subr.mxu0 0.0
  %382 = vmatpush2.msra.mxu0 0.0
  %383 = vmatprep.subr.mxu0 0.0
  %384 = vmatpush2.msra.mxu0 0.0
  %385 = vmatprep.subr.mxu0 0.0
  %386 = vmatpush2.msra.mxu0 0.0
  %387 = vmatprep.subr.mxu0 0.0
  %388 = vmatpush2.msra.mxu0 0.0
  %389 = vmatprep.subr.mxu0 0.0
  %390 = vmatpush2.msra.mxu0 0.0
  %391 = vmatprep.subr.mxu0 0.0
  %392 = vmatpush2.msra.mxu0 0.0
  %393 = vmatprep.subr.mxu0 0.0
  %394 = vmatpush2.msra.mxu0 0.0
  %395 = vmatprep.subr.mxu0 0.0
  %396 = vmatpush2.msra.mxu0 0.0
  %397 = vmatprep.mubr.f32.mxu0 0.0
  %398 = vmatmul.mubr.f32.gmra.mxu0 %v322
  %v399 = vpop.f32.mrf.mxu0
  %v400 = vadd.f32 %v304, %v399
  %v401 = vpop.f32.mrf.mxu0
  %402 = vmatprep.mubr.f32.mxu0 0.0
  %403 = vmatmul.mubr.f32.gmra.mxu0 %v325
  %v404 = vpop.f32.mrf.mxu0
  %v405 = vadd.f32 %v309, %v404
  %v406 = vpop.f32.mrf.mxu0
  %407 = vmatprep.mubr.f32.mxu0 0.0
  %408 = vmatmul.mubr.f32.gmra.mxu0 %v328
  %v409 = vpop.f32.mrf.mxu0
  %v410 = vadd.f32 %v314, %v409
  %v411 = vpop.f32.mrf.mxu0
  %412 = vmatprep.mubr.f32.mxu0 0.0
  %413 = vmatmul.mubr.f32.gmra.mxu0 %v331
  %v414 = vpop.f32.mrf.mxu0
  %v415 = vadd.f32 %v319, %v414
  %v416 = vpop.f32.mrf.mxu0
  %417 = vdwg.mxu0
  %v418 = vtanh.pop %v400
  %v419 = vtanh.pop %v405
  %v420 = vtanh.pop %v410
  %v421 = vtanh.pop %v415
  %v422 = vld [vmem:[%s7] sm:$0xff]
  %v423 = vld [vmem:[%s8] sm:$0xff]
  %425 = vset.pattern.permute.xlu0 0
  %426 = vperm.xlu0 %425, %v423
  %v427 = vpop.permute.xlu0 %426
  %v430 = vsel %vm191, %v422, 0
  %432 = vmatprep.subr.mxu0 0.0
  %433 = vmatpush1.msra.mxu0 0.0
  %434 = vmatprep.subr.mxu0 0.0
  %435 = vmatpush1.msra.mxu0 0.0
  %436 = vmatprep.subr.mxu0 0.0
  %437 = vmatpush1.msra.mxu0 0.0
  %438 = vmatprep.subr.mxu0 0.0
  %439 = vmatpush1.msra.mxu0 0.0
  %440 = vmatprep.subr.mxu0 0.0
  %441 = vmatpush1.msra.mxu0 0.0
  %442 = vmatprep.subr.mxu0 0.0
  %443 = vmatpush1.msra.mxu0 0.0
  %444 = vmatprep.subr.mxu0 0.0
  %445 = vmatpush1.msra.mxu0 0.0
  %446 = vmatprep.subr.mxu0 0.0
  %447 = vmatpush1.msra.mxu0 0.0
  %448 = vmatprep.subr.mxu0 0.0
  %449 = vmatpush1.msra.mxu0 0.0
  %450 = vmatprep.subr.mxu0 0.0
  %451 = vmatpush1.msra.mxu0 0.0
  %452 = vmatprep.subr.mxu0 0.0
  %453 = vmatpush1.msra.mxu0 0.0
  %454 = vmatprep.subr.mxu0 0.0
  %455 = vmatpush1.msra.mxu0 0.0
  %456 = vmatprep.subr.mxu0 0.0
  %457 = vmatpush1.msra.mxu0 %v421
  %458 = vmatprep.subr.mxu0 0.0
  %459 = vmatpush1.msra.mxu0 %v420
  %460 = vmatprep.subr.mxu0 0.0
  %461 = vmatpush1.msra.mxu0 %v419
  %462 = vmatprep.subr.mxu0 0.0
  %463 = vmatpush1.msra.mxu0 %v418
  %464 = vmatprep.subr.mxu0 0.0
  %465 = vmatpush2.msra.mxu0 0.0
  %466 = vmatprep.subr.mxu0 0.0
  %467 = vmatpush2.msra.mxu0 0.0
  %468 = vmatprep.subr.mxu0 0.0
  %469 = vmatpush2.msra.mxu0 0.0
  %470 = vmatprep.subr.mxu0 0.0
  %471 = vmatpush2.msra.mxu0 0.0
  %472 = vmatprep.subr.mxu0 0.0
  %473 = vmatpush2.msra.mxu0 0.0
  %474 = vmatprep.subr.mxu0 0.0
  %475 = vmatpush2.msra.mxu0 0.0
  %476 = vmatprep.subr.mxu0 0.0
  %477 = vmatpush2.msra.mxu0 0.0
  %478 = vmatprep.subr.mxu0 0.0
  %479 = vmatpush2.msra.mxu0 0.0
  %480 = vmatprep.subr.mxu0 0.0
  %481 = vmatpush2.msra.mxu0 0.0
  %482 = vmatprep.subr.mxu0 0.0
  %483 = vmatpush2.msra.mxu0 0.0
  %484 = vmatprep.subr.mxu0 0.0
  %485 = vmatpush2.msra.mxu0 0.0
  %486 = vmatprep.subr.mxu0 0.0
  %487 = vmatpush2.msra.mxu0 0.0
  %488 = vmatprep.subr.mxu0 0.0
  %489 = vmatpush2.msra.mxu0 0.0
  %490 = vmatprep.subr.mxu0 0.0
  %491 = vmatpush2.msra.mxu0 0.0
  %492 = vmatprep.subr.mxu0 0.0
  %493 = vmatpush2.msra.mxu0 0.0
  %494 = vmatprep.subr.mxu0 0.0
  %495 = vmatpush2.msra.mxu0 0.0
  %496 = vmatprep.mubr.f32.mxu0 0.0
  %497 = vmatmul.mubr.f32.gmra.mxu0 %v430
  %v498 = vpop.f32.mrf.mxu0
  %v499 = vadd.f32 %v427, %v498
  %v500 = vpop.f32.mrf.mxu0
  %501 = vdwg.mxu0
  %502 = vst [vmem:[%s9] sm:$0xff] %v499
  // Predicated region
  $region38: #{pinn_forward.1} parent=0 // pred_check
    _
  $region39: #{pinn_forward.1} parent=0 // pred_check_branch
    %504 = sbr.rel (0) target = $region41
  $region40: #{pinn_forward.1} parent=0 // pred_region
    _
  $region41: #{pinn_forward.1} parent=0 // pred_fallthru
    _
  // Predicated region
  $region42: #{pinn_forward.1} parent=0 // pred_check
    _
  $region43: #{pinn_forward.1} parent=0 // pred_check_branch
    %506 = sbr.rel (0) target = $region45
  $region44: #{pinn_forward.1} parent=0 // pred_region
    _
  $region45: #{pinn_forward.1} parent=0 // pred_fallthru
    _

</llo_original>
